<compile_context>
chip_gen: v7x
topology: tpu7x:2x2x1
jax: 0.10.0
libtpu: 0.0.40
codegen_flags: <defaults>
</compile_context>

<pallas_src>
import math

import jax
import jax.numpy as jnp
from jax.experimental import pallas as pl
from jax.experimental.pallas import tpu as pltpu


def mlp_kernel(x_ref, w1_ref, b1_ref, w2_ref, b2_ref, w3_ref, b3_ref, o_ref):
    """One batch tile.

    x_ref:  (3, TS, 128) VMEM -- features on the leading axis, batch packed
            densely over (sublane, lane).
    o_ref:  (2, TS, 128) VMEM -- class probabilities, same dense batch layout.
    w*/b*:  17 tiny params in SMEM, PyTorch (out, in) layout; read as scalars
            and broadcast across the (TS, 128) batch tile on the VPU. No MXU.
    """
    x0 = x_ref[0]          # (TS, 128) dense vregs
    x1 = x_ref[1]
    x2 = x_ref[2]

    # layer1: Linear(3 -> 3) + sigmoid   (9 scalar-broadcast FMAs, 3 EUP sigmoids)
    h1 = []
    for j in range(3):
        acc = (w1_ref[j, 0] * x0 + w1_ref[j, 1] * x1 + w1_ref[j, 2] * x2
               + b1_ref[j])
        h1.append(jax.nn.sigmoid(acc))

    # layer2: Linear(3 -> 2) + relu      (6 scalar-broadcast FMAs)
    h2 = []
    for j in range(2):
        acc = (w2_ref[j, 0] * h1[0] + w2_ref[j, 1] * h1[1] + w2_ref[j, 2] * h1[2]
               + b2_ref[j])
        h2.append(jnp.maximum(acc, 0.0))

    # out: Linear(2 -> 2) + 2-class softmax, folded into one logit difference:
    #   p0 = sigmoid((w3[0]-w3[1]).h2 + (b3[0]-b3[1])),  p1 = 1 - p0   (exact)
    dw0 = w3_ref[0, 0] - w3_ref[1, 0]
    dw1 = w3_ref[0, 1] - w3_ref[1, 1]
    db = b3_ref[0] - b3_ref[1]
    p0 = jax.nn.sigmoid(dw0 * h2[0] + dw1 * h2[1] + db)

    o_ref[0] = p0          # dense full-vreg stores (1 per class row)
    o_ref[1] = 1.0 - p0


def _tile_layout(B, *, max_tile_sublanes=256, min_tiles=2):
    """Pick (num_tiles, tile_sublanes, total_sublanes) for a batch of B.

    Batch is packed as (R, 128): R rows of 128 lanes. Tile sublane count TS is a
    multiple of 8 (vreg constraint); R = num_tiles * TS. num_tiles >= 2 whenever
    the batch is large enough, so v7x's two TensorCores both get work.
    """
    r_min = -(-B // 128)                                   # rows of 128 needed
    nt = -(-r_min // max_tile_sublanes)                    # tiles to respect cap
    if r_min >= min_tiles * 8:
        nt = max(nt, min_tiles)
    ts = -(-r_min // nt)
    ts = ((ts + 7) // 8) * 8                               # sublane multiple of 8
    return nt, ts, nt * ts


def neural_network_forward(x, params, *, max_tile_sublanes=256):
    """x: (B, 3) float32 -> (B, 2) float32 softmax probabilities."""
    w1, b1, w2, b2, w3, b3 = params
    B = x.shape[0]

    nt, ts, r = _tile_layout(B, max_tile_sublanes=max_tile_sublanes)
    bp = r * 128

    # Single fused pad + transpose + reshape into the dense (3, R, 128) layout.
    x_t = jnp.pad(x, ((0, bp - B), (0, 0))).T.reshape(3, r, 128)

    smem = pl.BlockSpec(memory_space=pltpu.MemorySpace.SMEM)

    out_t = pl.pallas_call(
        mlp_kernel,
        out_shape=jax.ShapeDtypeStruct((2, r, 128), jnp.float32),
        grid=(nt,),
        in_specs=[
            pl.BlockSpec((3, ts, 128), lambda i: (0, i, 0)),   # dense batch tile
            smem, smem, smem, smem, smem, smem,                # 17 params in SMEM
        ],
        out_specs=pl.BlockSpec((2, ts, 128), lambda i: (0, i, 0)),
        compiler_params=pltpu.CompilerParams(
            dimension_semantics=("parallel",),
        ),
    )(x_t, w1, b1, w2, b2, w3, b3)

    return out_t.reshape(2, bp)[:, :B].T


def init_params(key):
    """Deterministic init mirroring the PyTorch module's __init__.

    Weights kept in PyTorch (out, in) layout. Biases use nn.Linear's default
    U(-1/sqrt(fan_in), 1/sqrt(fan_in)).
    """
    k1, k2, k3, kb1, kb2, kb3 = jax.random.split(key, 6)

    # layer1.weight (3, 3): xavier_normal_, std = sqrt(2 / (fan_in + fan_out))
    std1 = math.sqrt(2.0 / (3 + 3))
    w1 = jax.random.normal(k1, (3, 3), jnp.float32) * std1
    b1 = jax.random.uniform(kb1, (3,), jnp.float32,
                            minval=-1.0 / math.sqrt(3), maxval=1.0 / math.sqrt(3))

    # layer2.weight (2, 3): kaiming_normal_, std = sqrt(2 / fan_in)
    std2 = math.sqrt(2.0 / 3)
    w2 = jax.random.normal(k2, (2, 3), jnp.float32) * std2
    b2 = jax.random.uniform(kb2, (2,), jnp.float32,
                            minval=-1.0 / math.sqrt(3), maxval=1.0 / math.sqrt(3))

    # out.weight (2, 2): uniform_ default U(0, 1)
    w3 = jax.random.uniform(k3, (2, 2), jnp.float32, minval=0.0, maxval=1.0)
    b3 = jax.random.uniform(kb3, (2,), jnp.float32,
                            minval=-1.0 / math.sqrt(2), maxval=1.0 / math.sqrt(2))

    return w1, b1, w2, b2, w3, b3


def reference_forward(x, params):
    """Pure-JAX reference (PyTorch nn.Linear semantics: y = x @ W.T + b)."""
    w1, b1, w2, b2, w3, b3 = params
    h1 = jax.nn.sigmoid(x @ w1.T + b1)
    h2 = jnp.maximum(h1 @ w2.T + b2, 0.0)
    return jax.nn.softmax(h2 @ w3.T + b3, axis=-1)


if __name__ == "__main__":
    key = jax.random.PRNGKey(0)
    kx, kp = jax.random.split(key)

    B = 8
    x = jax.random.normal(kx, (B, 3), jnp.float32)
    params = init_params(kp)

    out = neural_network_forward(x, params)
    out = jax.block_until_ready(out)

    ref = reference_forward(x, params)
    assert out.shape == (B, 2)
    assert jnp.allclose(out, ref, atol=1e-5, rtol=1e-5)
    assert jnp.allclose(jnp.sum(out, axis=-1), jnp.ones((B,)), atol=1e-5)

    # Also exercise a multi-tile, non-divisible batch to check the tiling path.
    B2 = 8193
    x2 = jax.random.normal(kx, (B2, 3), jnp.float32)
    out2 = jax.block_until_ready(neural_network_forward(x2, params))
    ref2 = reference_forward(x2, params)
    assert out2.shape == (B2, 2)
    assert jnp.allclose(out2, ref2, atol=1e-5, rtol=1e-5)

    print("KERNEL_OK")
</pallas_src>

<mosaic_0001>
module attributes {stable_mosaic.version = 11 : i64} {
  func.func @mlp_kernel(%arg0: i32, %arg1: memref<3x8x128xf32, #tpu.memory_space<vmem>>, %arg2: memref<3x3xf32, #tpu.memory_space<smem>>, %arg3: memref<3xf32, #tpu.memory_space<smem>>, %arg4: memref<2x3xf32, #tpu.memory_space<smem>>, %arg5: memref<2xf32, #tpu.memory_space<smem>>, %arg6: memref<2x2xf32, #tpu.memory_space<smem>>, %arg7: memref<2xf32, #tpu.memory_space<smem>>, %arg8: memref<2x8x128xf32, #tpu.memory_space<vmem>>) attributes {dimension_semantics = [#tpu.dimension_semantics<parallel>], iteration_bounds = array<i64: 1>, scalar_prefetch = 0 : i64, scratch_operands = 0 : i64, tpu.core_type = #tpu.core_type<tc>, window_params = [{transform_indices = @transform_0, window_bounds = array<i64: 3, 8, 128>}, {transform_indices = @transform_1, window_bounds = array<i64: 3, 3>}, {transform_indices = @transform_2, window_bounds = array<i64: 3>}, {transform_indices = @transform_3, window_bounds = array<i64: 2, 3>}, {transform_indices = @transform_4, window_bounds = array<i64: 2>}, {transform_indices = @transform_5, window_bounds = array<i64: 2, 2>}, {transform_indices = @transform_6, window_bounds = array<i64: 2>}, {transform_indices = @transform_7, window_bounds = array<i64: 2, 8, 128>}]} {
    %c0 = arith.constant 0 : index
    %c0_0 = arith.constant 0 : index
    %c0_1 = arith.constant 0 : index
    %0 = vector.load %arg1[%c0, %c0_0, %c0_1] : memref<3x8x128xf32, #tpu.memory_space<vmem>>, vector<1x8x128xf32>
    %1 = vector.shape_cast %0 : vector<1x8x128xf32> to vector<8x128xf32>
    %c1 = arith.constant 1 : index
    %c0_2 = arith.constant 0 : index
    %c0_3 = arith.constant 0 : index
    %2 = vector.load %arg1[%c1, %c0_2, %c0_3] : memref<3x8x128xf32, #tpu.memory_space<vmem>>, vector<1x8x128xf32>
    %3 = vector.shape_cast %2 : vector<1x8x128xf32> to vector<8x128xf32>
    %c2 = arith.constant 2 : index
    %c0_4 = arith.constant 0 : index
    %c0_5 = arith.constant 0 : index
    %4 = vector.load %arg1[%c2, %c0_4, %c0_5] : memref<3x8x128xf32, #tpu.memory_space<vmem>>, vector<1x8x128xf32>
    %5 = vector.shape_cast %4 : vector<1x8x128xf32> to vector<8x128xf32>
    %c0_6 = arith.constant 0 : index
    %c0_7 = arith.constant 0 : index
    %6 = memref.load %arg2[%c0_6, %c0_7] : memref<3x3xf32, #tpu.memory_space<smem>>
    %7 = vector.broadcast %6 : f32 to vector<8x128xf32>
    %8 = arith.mulf %7, %1 : vector<8x128xf32>
    %c0_8 = arith.constant 0 : index
    %c1_9 = arith.constant 1 : index
    %9 = memref.load %arg2[%c0_8, %c1_9] : memref<3x3xf32, #tpu.memory_space<smem>>
    %10 = vector.broadcast %9 : f32 to vector<8x128xf32>
    %11 = arith.mulf %10, %3 : vector<8x128xf32>
    %12 = arith.addf %8, %11 : vector<8x128xf32>
    %c0_10 = arith.constant 0 : index
    %c2_11 = arith.constant 2 : index
    %13 = memref.load %arg2[%c0_10, %c2_11] : memref<3x3xf32, #tpu.memory_space<smem>>
    %14 = vector.broadcast %13 : f32 to vector<8x128xf32>
    %15 = arith.mulf %14, %5 : vector<8x128xf32>
    %16 = arith.addf %12, %15 : vector<8x128xf32>
    %c0_12 = arith.constant 0 : index
    %17 = memref.load %arg3[%c0_12] : memref<3xf32, #tpu.memory_space<smem>>
    %18 = vector.broadcast %17 : f32 to vector<8x128xf32>
    %19 = arith.addf %16, %18 : vector<8x128xf32>
    %20 = arith.negf %19 : vector<8x128xf32>
    %21 = math.exp %20 : vector<8x128xf32>
    %cst = arith.constant 1.000000e+00 : f32
    %22 = vector.broadcast %cst : f32 to vector<8x128xf32>
    %23 = arith.addf %22, %21 : vector<8x128xf32>
    %24 = arith.divf %22, %23 : vector<8x128xf32>
    %c1_13 = arith.constant 1 : index
    %c0_14 = arith.constant 0 : index
    %25 = memref.load %arg2[%c1_13, %c0_14] : memref<3x3xf32, #tpu.memory_space<smem>>
    %26 = vector.broadcast %25 : f32 to vector<8x128xf32>
    %27 = arith.mulf %26, %1 : vector<8x128xf32>
    %c1_15 = arith.constant 1 : index
    %c1_16 = arith.constant 1 : index
    %28 = memref.load %arg2[%c1_15, %c1_16] : memref<3x3xf32, #tpu.memory_space<smem>>
    %29 = vector.broadcast %28 : f32 to vector<8x128xf32>
    %30 = arith.mulf %29, %3 : vector<8x128xf32>
    %31 = arith.addf %27, %30 : vector<8x128xf32>
    %c1_17 = arith.constant 1 : index
    %c2_18 = arith.constant 2 : index
    %32 = memref.load %arg2[%c1_17, %c2_18] : memref<3x3xf32, #tpu.memory_space<smem>>
    %33 = vector.broadcast %32 : f32 to vector<8x128xf32>
    %34 = arith.mulf %33, %5 : vector<8x128xf32>
    %35 = arith.addf %31, %34 : vector<8x128xf32>
    %c1_19 = arith.constant 1 : index
    %36 = memref.load %arg3[%c1_19] : memref<3xf32, #tpu.memory_space<smem>>
    %37 = vector.broadcast %36 : f32 to vector<8x128xf32>
    %38 = arith.addf %35, %37 : vector<8x128xf32>
    %39 = arith.negf %38 : vector<8x128xf32>
    %40 = math.exp %39 : vector<8x128xf32>
    %cst_20 = arith.constant 1.000000e+00 : f32
    %41 = vector.broadcast %cst_20 : f32 to vector<8x128xf32>
    %42 = arith.addf %41, %40 : vector<8x128xf32>
    %43 = arith.divf %41, %42 : vector<8x128xf32>
    %c2_21 = arith.constant 2 : index
    %c0_22 = arith.constant 0 : index
    %44 = memref.load %arg2[%c2_21, %c0_22] : memref<3x3xf32, #tpu.memory_space<smem>>
    %45 = vector.broadcast %44 : f32 to vector<8x128xf32>
    %46 = arith.mulf %45, %1 : vector<8x128xf32>
    %c2_23 = arith.constant 2 : index
    %c1_24 = arith.constant 1 : index
    %47 = memref.load %arg2[%c2_23, %c1_24] : memref<3x3xf32, #tpu.memory_space<smem>>
    %48 = vector.broadcast %47 : f32 to vector<8x128xf32>
    %49 = arith.mulf %48, %3 : vector<8x128xf32>
    %50 = arith.addf %46, %49 : vector<8x128xf32>
    %c2_25 = arith.constant 2 : index
    %c2_26 = arith.constant 2 : index
    %51 = memref.load %arg2[%c2_25, %c2_26] : memref<3x3xf32, #tpu.memory_space<smem>>
    %52 = vector.broadcast %51 : f32 to vector<8x128xf32>
    %53 = arith.mulf %52, %5 : vector<8x128xf32>
    %54 = arith.addf %50, %53 : vector<8x128xf32>
    %c2_27 = arith.constant 2 : index
    %55 = memref.load %arg3[%c2_27] : memref<3xf32, #tpu.memory_space<smem>>
    %56 = vector.broadcast %55 : f32 to vector<8x128xf32>
    %57 = arith.addf %54, %56 : vector<8x128xf32>
    %58 = arith.negf %57 : vector<8x128xf32>
    %59 = math.exp %58 : vector<8x128xf32>
    %cst_28 = arith.constant 1.000000e+00 : f32
    %60 = vector.broadcast %cst_28 : f32 to vector<8x128xf32>
    %61 = arith.addf %60, %59 : vector<8x128xf32>
    %62 = arith.divf %60, %61 : vector<8x128xf32>
    %c0_29 = arith.constant 0 : index
    %c0_30 = arith.constant 0 : index
    %63 = memref.load %arg4[%c0_29, %c0_30] : memref<2x3xf32, #tpu.memory_space<smem>>
    %64 = vector.broadcast %63 : f32 to vector<8x128xf32>
    %65 = arith.mulf %64, %24 : vector<8x128xf32>
    %c0_31 = arith.constant 0 : index
    %c1_32 = arith.constant 1 : index
    %66 = memref.load %arg4[%c0_31, %c1_32] : memref<2x3xf32, #tpu.memory_space<smem>>
    %67 = vector.broadcast %66 : f32 to vector<8x128xf32>
    %68 = arith.mulf %67, %43 : vector<8x128xf32>
    %69 = arith.addf %65, %68 : vector<8x128xf32>
    %c0_33 = arith.constant 0 : index
    %c2_34 = arith.constant 2 : index
    %70 = memref.load %arg4[%c0_33, %c2_34] : memref<2x3xf32, #tpu.memory_space<smem>>
    %71 = vector.broadcast %70 : f32 to vector<8x128xf32>
    %72 = arith.mulf %71, %62 : vector<8x128xf32>
    %73 = arith.addf %69, %72 : vector<8x128xf32>
    %c0_35 = arith.constant 0 : index
    %74 = memref.load %arg5[%c0_35] : memref<2xf32, #tpu.memory_space<smem>>
    %75 = vector.broadcast %74 : f32 to vector<8x128xf32>
    %76 = arith.addf %73, %75 : vector<8x128xf32>
    %cst_36 = arith.constant 0.000000e+00 : f32
    %77 = vector.broadcast %cst_36 : f32 to vector<8x128xf32>
    %78 = arith.maximumf %76, %77 : vector<8x128xf32>
    %c1_37 = arith.constant 1 : index
    %c0_38 = arith.constant 0 : index
    %79 = memref.load %arg4[%c1_37, %c0_38] : memref<2x3xf32, #tpu.memory_space<smem>>
    %80 = vector.broadcast %79 : f32 to vector<8x128xf32>
    %81 = arith.mulf %80, %24 : vector<8x128xf32>
    %c1_39 = arith.constant 1 : index
    %c1_40 = arith.constant 1 : index
    %82 = memref.load %arg4[%c1_39, %c1_40] : memref<2x3xf32, #tpu.memory_space<smem>>
    %83 = vector.broadcast %82 : f32 to vector<8x128xf32>
    %84 = arith.mulf %83, %43 : vector<8x128xf32>
    %85 = arith.addf %81, %84 : vector<8x128xf32>
    %c1_41 = arith.constant 1 : index
    %c2_42 = arith.constant 2 : index
    %86 = memref.load %arg4[%c1_41, %c2_42] : memref<2x3xf32, #tpu.memory_space<smem>>
    %87 = vector.broadcast %86 : f32 to vector<8x128xf32>
    %88 = arith.mulf %87, %62 : vector<8x128xf32>
    %89 = arith.addf %85, %88 : vector<8x128xf32>
    %c1_43 = arith.constant 1 : index
    %90 = memref.load %arg5[%c1_43] : memref<2xf32, #tpu.memory_space<smem>>
    %91 = vector.broadcast %90 : f32 to vector<8x128xf32>
    %92 = arith.addf %89, %91 : vector<8x128xf32>
    %cst_44 = arith.constant 0.000000e+00 : f32
    %93 = vector.broadcast %cst_44 : f32 to vector<8x128xf32>
    %94 = arith.maximumf %92, %93 : vector<8x128xf32>
    %c0_45 = arith.constant 0 : index
    %c0_46 = arith.constant 0 : index
    %95 = memref.load %arg6[%c0_45, %c0_46] : memref<2x2xf32, #tpu.memory_space<smem>>
    %c1_47 = arith.constant 1 : index
    %c0_48 = arith.constant 0 : index
    %96 = memref.load %arg6[%c1_47, %c0_48] : memref<2x2xf32, #tpu.memory_space<smem>>
    %97 = arith.subf %95, %96 : f32
    %c0_49 = arith.constant 0 : index
    %c1_50 = arith.constant 1 : index
    %98 = memref.load %arg6[%c0_49, %c1_50] : memref<2x2xf32, #tpu.memory_space<smem>>
    %c1_51 = arith.constant 1 : index
    %c1_52 = arith.constant 1 : index
    %99 = memref.load %arg6[%c1_51, %c1_52] : memref<2x2xf32, #tpu.memory_space<smem>>
    %100 = arith.subf %98, %99 : f32
    %c0_53 = arith.constant 0 : index
    %101 = memref.load %arg7[%c0_53] : memref<2xf32, #tpu.memory_space<smem>>
    %c1_54 = arith.constant 1 : index
    %102 = memref.load %arg7[%c1_54] : memref<2xf32, #tpu.memory_space<smem>>
    %103 = arith.subf %101, %102 : f32
    %104 = vector.broadcast %97 : f32 to vector<8x128xf32>
    %105 = arith.mulf %104, %78 : vector<8x128xf32>
    %106 = vector.broadcast %100 : f32 to vector<8x128xf32>
    %107 = arith.mulf %106, %94 : vector<8x128xf32>
    %108 = arith.addf %105, %107 : vector<8x128xf32>
    %109 = vector.broadcast %103 : f32 to vector<8x128xf32>
    %110 = arith.addf %108, %109 : vector<8x128xf32>
    %111 = arith.negf %110 : vector<8x128xf32>
    %112 = math.exp %111 : vector<8x128xf32>
    %cst_55 = arith.constant 1.000000e+00 : f32
    %113 = vector.broadcast %cst_55 : f32 to vector<8x128xf32>
    %114 = arith.addf %113, %112 : vector<8x128xf32>
    %115 = arith.divf %113, %114 : vector<8x128xf32>
    %c0_56 = arith.constant 0 : index
    %c0_57 = arith.constant 0 : index
    %c0_58 = arith.constant 0 : index
    %116 = vector.load %arg8[%c0_56, %c0_57, %c0_58] : memref<2x8x128xf32, #tpu.memory_space<vmem>>, vector<1x8x128xf32>
    %117 = vector.shape_cast %116 : vector<1x8x128xf32> to vector<8x128xf32>
    %118 = vector.shape_cast %115 : vector<8x128xf32> to vector<1x8x128xf32>
    tpu.vector_store %arg8[%c0_56, %c0_57, %c0_58], %118 {strides = array<i32>} : memref<2x8x128xf32, #tpu.memory_space<vmem>>, vector<1x8x128xf32>,
    %cst_59 = arith.constant 1.000000e+00 : f32
    %119 = vector.broadcast %cst_59 : f32 to vector<8x128xf32>
    %120 = arith.subf %119, %115 : vector<8x128xf32>
    %c1_60 = arith.constant 1 : index
    %c0_61 = arith.constant 0 : index
    %c0_62 = arith.constant 0 : index
    %121 = vector.load %arg8[%c1_60, %c0_61, %c0_62] : memref<2x8x128xf32, #tpu.memory_space<vmem>>, vector<1x8x128xf32>
    %122 = vector.shape_cast %121 : vector<1x8x128xf32> to vector<8x128xf32>
    %123 = vector.shape_cast %120 : vector<8x128xf32> to vector<1x8x128xf32>
    tpu.vector_store %arg8[%c1_60, %c0_61, %c0_62], %123 {strides = array<i32>} : memref<2x8x128xf32, #tpu.memory_space<vmem>>, vector<1x8x128xf32>,
    return
  }
  func.func @transform_0(%arg0: i32) -> (i32, i32, i32) {
    %c0_i32 = arith.constant 0 : i32
    %c0_i32_0 = arith.constant 0 : i32
    %c0_i32_1 = arith.constant 0 : i32
    return %c0_i32, %arg0, %c0_i32_0 : i32, i32, i32
  }
  func.func @transform_1(%arg0: i32) -> (i32, i32) {
    %c0_i32 = arith.constant 0 : i32
    %c0_i32_0 = arith.constant 0 : i32
    %c0_i32_1 = arith.constant 0 : i32
    return %c0_i32, %c0_i32_0 : i32, i32
  }
  func.func @transform_2(%arg0: i32) -> i32 {
    %c0_i32 = arith.constant 0 : i32
    %c0_i32_0 = arith.constant 0 : i32
    return %c0_i32 : i32
  }
  func.func @transform_3(%arg0: i32) -> (i32, i32) {
    %c0_i32 = arith.constant 0 : i32
    %c0_i32_0 = arith.constant 0 : i32
    %c0_i32_1 = arith.constant 0 : i32
    return %c0_i32, %c0_i32_0 : i32, i32
  }
  func.func @transform_4(%arg0: i32) -> i32 {
    %c0_i32 = arith.constant 0 : i32
    %c0_i32_0 = arith.constant 0 : i32
    return %c0_i32 : i32
  }
  func.func @transform_5(%arg0: i32) -> (i32, i32) {
    %c0_i32 = arith.constant 0 : i32
    %c0_i32_0 = arith.constant 0 : i32
    %c0_i32_1 = arith.constant 0 : i32
    return %c0_i32, %c0_i32_0 : i32, i32
  }
  func.func @transform_6(%arg0: i32) -> i32 {
    %c0_i32 = arith.constant 0 : i32
    %c0_i32_0 = arith.constant 0 : i32
    return %c0_i32 : i32
  }
  func.func @transform_7(%arg0: i32) -> (i32, i32, i32) {
    %c0_i32 = arith.constant 0 : i32
    %c0_i32_0 = arith.constant 0 : i32
    %c0_i32_1 = arith.constant 0 : i32
    return %c0_i32, %arg0, %c0_i32_0 : i32, i32, i32
  }
}

</mosaic_0001>

<llo_original>
// kernel: tpu_custom_call.1
$region0: #{tpu_custom_call.1}
  #allocation0 [shape = 'u32[]', space=smem, size = 0x4, offset = 0x4, fixed_abs, tag = 'smem constant byte address 0x4 - core index']
  #allocation1 [shape = 'u32[144,128]{1,0:T(1,128)}', space=vmem, size = 0x12000, scoped, tag = 'internal scratch']
  %s0 = inlined_call_operand.hbm [shape: f32[3,8,128], index: 0, kind: input, shape index: {}]
  %s1 = inlined_call_operand.hbm [shape: f32[3,3], index: 1, kind: input, shape index: {}]
  %s2 = inlined_call_operand.vmem [shape: f32[3], index: 2, kind: input, shape index: {}]
  %s3 = inlined_call_operand.vmem [shape: f32[2,3], index: 3, kind: input, shape index: {}]
  %s4 = inlined_call_operand.vmem [shape: f32[2], index: 4, kind: input, shape index: {}]
  %s5 = inlined_call_operand.vmem [shape: f32[2,2], index: 5, kind: input, shape index: {}]
  %s6 = inlined_call_operand.vmem [shape: f32[2], index: 6, kind: input, shape index: {}]
  %s7 = inlined_call_operand.hbm [shape: f32[2,8,128], index: 7, kind: output, shape index: {}]
  %s8 = sld [smem:[#allocation0]]
  $region66: #{tpu_custom_call.1} parent=0
    _
  %s10 = ssub.s32 1, %s8
  %s11 = scalar_select 0, %s10, %s8
  $region1: #{tpu_custom_call.1} parent=0
    #allocation2 [shape = 'u8[12288]{0}', space=vmem, size = 0x3000, scoped, tag = 'input window, operand 0, single buffered']
    #allocation3 [shape = 's32[1]{0}', space=sflag, size = 0x4, scoped, tag = 'scoped memory for tpu_custom_call.1']
    #allocation4 [shape = 's32[1]{0}', space=sflag, size = 0x4, scoped, tag = 'scoped memory for tpu_custom_call.1']
    #allocation5 [shape = 's32[1]{0}', space=sflag, size = 0x4, scoped, tag = 'scoped memory for tpu_custom_call.1']
    #allocation6 [shape = 's32[1]{0}', space=sflag, size = 0x4, scoped, tag = 'scoped memory for tpu_custom_call.1']
    #allocation7 [shape = 'u8[2048]{0}', space=smem, size = 0x800, scoped, tag = 'input window, operand 1, single buffered']
    #allocation8 [shape = 'u8[512]{0}', space=smem, size = 0x200, scoped, tag = 'input window, operand 2, single buffered']
    #allocation9 [shape = 'u8[1024]{0}', space=smem, size = 0x400, scoped, tag = 'input window, operand 3, single buffered']
    #allocation10 [shape = 's32[1]{0}', space=sflag, size = 0x4, scoped, tag = 'scoped memory for tpu_custom_call.1']
    #allocation11 [shape = 'u8[512]{0}', space=smem, size = 0x200, scoped, tag = 'input window, operand 4, single buffered']
    #allocation12 [shape = 'u8[1024]{0}', space=smem, size = 0x400, scoped, tag = 'input window, operand 5, single buffered']
    #allocation13 [shape = 's32[1]{0}', space=sflag, size = 0x4, scoped, tag = 'scoped memory for tpu_custom_call.1']
    #allocation14 [shape = 'u8[512]{0}', space=smem, size = 0x200, scoped, tag = 'input window, operand 6, single buffered']
    #allocation15 [shape = 'u8[8192]{0}', space=vmem, size = 0x2000, scoped, tag = 'output window, operand 0, single buffered']
    %12 = vsyncpa [#allocation3], 0
    %13 = vsyncpa [#allocation5], 0
    %14 = vsyncpa [#allocation6], 0
    %15 = vsyncpa [#allocation10], 0
    %16 = vsyncpa [#allocation13], 0
    %17 = vsyncpa [#allocation4], 0
    // Predicated region
    $region2: #{tpu_custom_call.1} parent=1 // pred_check
      _
    $region3: #{tpu_custom_call.1} parent=1 // pred_check_branch
      %19 = sbr.rel (0) target = $region5
    $region4: #{tpu_custom_call.1} parent=1 // pred_region
      %s21 = ssub.s32 384, 384
      %22 = vsyncadd [#allocation3], %s21
      %s23 = sshll.u32 [#allocation2], 4
      %s24 = int_to_ptr.vmem [resolvable:$true] %s23
      %29 = dma.hbm_to_vmem [thread:$0]  %s0, 384, %s24, [#allocation3], 128, 128, 8
    $region5: #{tpu_custom_call.1} parent=1 // pred_fallthru
      _
    // Predicated region
    $region6: #{tpu_custom_call.1} parent=1 // pred_check
      _
    $region7: #{tpu_custom_call.1} parent=1 // pred_check_branch
      %31 = sbr.rel (0) target = $region9
    $region8: #{tpu_custom_call.1} parent=1 // pred_region
      %s33 = ssub.s32 64, 64
      %34 = vsyncadd [#allocation5], %s33
      %37 = dma.hbm_to_smem %s1, 64, [#allocation7], [#allocation5]
    $region9: #{tpu_custom_call.1} parent=1 // pred_fallthru
      _
    // Predicated region
    $region10: #{tpu_custom_call.1} parent=1 // pred_check
      _
    $region11: #{tpu_custom_call.1} parent=1 // pred_check_branch
      %39 = sbr.rel (0) target = $region13
    $region12: #{tpu_custom_call.1} parent=1 // pred_region
      %s41 = ssub.s32 16, 16
      %42 = vsyncadd [#allocation6], %s41
      %s44 = sshll.u32 %s2, 4
      %s45 = int_to_ptr.vmem [resolvable:$true] %s44
      %47 = dma.vmem_to_smem %s45, 16, [#allocation8], [#allocation6]
    $region13: #{tpu_custom_call.1} parent=1 // pred_fallthru
      _
    // Predicated region
    $region14: #{tpu_custom_call.1} parent=1 // pred_check
      _
    $region15: #{tpu_custom_call.1} parent=1 // pred_check_branch
      %49 = sbr.rel (0) target = $region17
    $region16: #{tpu_custom_call.1} parent=1 // pred_region
      %s51 = ssub.s32 32, 32
      %52 = vsyncadd [#allocation10], %s51
      %s54 = sshll.u32 %s3, 4
      %s55 = int_to_ptr.vmem [resolvable:$true] %s54
      %57 = dma.vmem_to_smem %s55, 32, [#allocation9], [#allocation10]
    $region17: #{tpu_custom_call.1} parent=1 // pred_fallthru
      _
    // Predicated region
    $region18: #{tpu_custom_call.1} parent=1 // pred_check
      _
    $region19: #{tpu_custom_call.1} parent=1 // pred_check_branch
      %59 = sbr.rel (0) target = $region21
    $region20: #{tpu_custom_call.1} parent=1 // pred_region
      %s61 = ssub.s32 16, 16
      %62 = vsyncadd [#allocation10], %s61
      %s64 = sshll.u32 %s4, 4
      %s65 = int_to_ptr.vmem [resolvable:$true] %s64
      %67 = dma.vmem_to_smem %s65, 16, [#allocation11], [#allocation10]
    $region21: #{tpu_custom_call.1} parent=1 // pred_fallthru
      _
    // Predicated region
    $region22: #{tpu_custom_call.1} parent=1 // pred_check
      _
    $region23: #{tpu_custom_call.1} parent=1 // pred_check_branch
      %69 = sbr.rel (0) target = $region25
    $region24: #{tpu_custom_call.1} parent=1 // pred_region
      %s71 = ssub.s32 32, 32
      %72 = vsyncadd [#allocation13], %s71
      %s74 = sshll.u32 %s5, 4
      %s75 = int_to_ptr.vmem [resolvable:$true] %s74
      %77 = dma.vmem_to_smem %s75, 32, [#allocation12], [#allocation13]
    $region25: #{tpu_custom_call.1} parent=1 // pred_fallthru
      _
    // Predicated region
    $region26: #{tpu_custom_call.1} parent=1 // pred_check
      _
    $region27: #{tpu_custom_call.1} parent=1 // pred_check_branch
      %79 = sbr.rel (0) target = $region29
    $region28: #{tpu_custom_call.1} parent=1 // pred_region
      %s81 = ssub.s32 16, 16
      %82 = vsyncadd [#allocation13], %s81
      %s84 = sshll.u32 %s6, 4
      %s85 = int_to_ptr.vmem [resolvable:$true] %s84
      %87 = dma.vmem_to_smem %s85, 16, [#allocation14], [#allocation13]
    $region29: #{tpu_custom_call.1} parent=1 // pred_fallthru
      _
    // Predicated region
    $region30: #{tpu_custom_call.1} parent=1 // pred_check
      _
    $region31: #{tpu_custom_call.1} parent=1 // pred_check_branch
      %89 = sbr.rel (0) target = $region33
    $region32: #{tpu_custom_call.1} parent=1 // pred_region
      %90 = dma.done [#allocation3], 384
    $region33: #{tpu_custom_call.1} parent=1 // pred_fallthru
      _
    // Predicated region
    $region34: #{tpu_custom_call.1} parent=1 // pred_check
      _
    $region35: #{tpu_custom_call.1} parent=1 // pred_check_branch
      %92 = sbr.rel (0) target = $region37
    $region36: #{tpu_custom_call.1} parent=1 // pred_region
      %93 = dma.done [#allocation5], 64
    $region37: #{tpu_custom_call.1} parent=1 // pred_fallthru
      _
    // Predicated region
    $region38: #{tpu_custom_call.1} parent=1 // pred_check
      _
    $region39: #{tpu_custom_call.1} parent=1 // pred_check_branch
      %95 = sbr.rel (0) target = $region41
    $region40: #{tpu_custom_call.1} parent=1 // pred_region
      %96 = dma.done [#allocation6], 16
    $region41: #{tpu_custom_call.1} parent=1 // pred_fallthru
      _
    // Predicated region
    $region42: #{tpu_custom_call.1} parent=1 // pred_check
      _
    $region43: #{tpu_custom_call.1} parent=1 // pred_check_branch
      %98 = sbr.rel (0) target = $region45
    $region44: #{tpu_custom_call.1} parent=1 // pred_region
      %99 = dma.done [#allocation10], 32
    $region45: #{tpu_custom_call.1} parent=1 // pred_fallthru
      _
    // Predicated region
    $region46: #{tpu_custom_call.1} parent=1 // pred_check
      _
    $region47: #{tpu_custom_call.1} parent=1 // pred_check_branch
      %101 = sbr.rel (0) target = $region49
    $region48: #{tpu_custom_call.1} parent=1 // pred_region
      %102 = dma.done [#allocation10], 16
    $region49: #{tpu_custom_call.1} parent=1 // pred_fallthru
      _
    // Predicated region
    $region50: #{tpu_custom_call.1} parent=1 // pred_check
      _
    $region51: #{tpu_custom_call.1} parent=1 // pred_check_branch
      %104 = sbr.rel (0) target = $region53
    $region52: #{tpu_custom_call.1} parent=1 // pred_region
      %105 = dma.done [#allocation13], 32
    $region53: #{tpu_custom_call.1} parent=1 // pred_fallthru
      _
    // Predicated region
    $region54: #{tpu_custom_call.1} parent=1 // pred_check
      _
    $region55: #{tpu_custom_call.1} parent=1 // pred_check_branch
      %107 = sbr.rel (0) target = $region57
    $region56: #{tpu_custom_call.1} parent=1 // pred_region
      %108 = dma.done [#allocation13], 16
    $region57: #{tpu_custom_call.1} parent=1 // pred_fallthru
      _
    %109 = sfence
    %v110 = vld [vmem:[#allocation2] sm:$0xff]
    %s111 = scalar_lea.vmem [#allocation2], 8
    %v112 = vld [vmem:[%s111] sm:$0xff]
    %s113 = scalar_lea.vmem [#allocation2], 16
    %v114 = vld [vmem:[%s113] sm:$0xff]
    %s115 = sld [smem:[#allocation7]]
    %v116 = vstv %s115
    %v117 = vmul.f32 %v116, %v110
    %s118 = sld [smem:[#allocation7 + $0x1]]
    %v119 = vstv %s118
    %v120 = vmul.f32 %v119, %v112
    %v121 = vadd.f32 %v117, %v120
    %s122 = sld [smem:[#allocation7 + $0x2]]
    %v123 = vstv %s122
    %v124 = vmul.f32 %v123, %v114
    %v125 = vadd.f32 %v121, %v124
    %s126 = sld [smem:[#allocation8]]
    %v127 = vstv %s126
    %v128 = vadd.f32 %v125, %v127
    %v129 = vxor.u32 %v128, 2147483648
    %v130 = vmul.f32 %v129, 1.442695
    %v131 = vpow.pop %v130
    %v132 = vadd.f32 %v131, 1.0
    %v133 = vrcp.pop %v132
    %v134 = vmul.f32 1.0, %v133
    %s135 = sld [smem:[#allocation7 + $0x80]]
    %v136 = vstv %s135
    %v137 = vmul.f32 %v136, %v110
    %s138 = sld [smem:[#allocation7 + $0x81]]
    %v139 = vstv %s138
    %v140 = vmul.f32 %v139, %v112
    %v141 = vadd.f32 %v137, %v140
    %s142 = sld [smem:[#allocation7 + $0x82]]
    %v143 = vstv %s142
    %v144 = vmul.f32 %v143, %v114
    %v145 = vadd.f32 %v141, %v144
    %s146 = sld [smem:[#allocation8 + $0x1]]
    %v147 = vstv %s146
    %v148 = vadd.f32 %v145, %v147
    %v149 = vxor.u32 %v148, 2147483648
    %v150 = vmul.f32 %v149, 1.442695
    %v151 = vpow.pop %v150
    %v152 = vadd.f32 %v151, 1.0
    %v153 = vrcp.pop %v152
    %v154 = vmul.f32 1.0, %v153
    %s155 = sld [smem:[#allocation7 + $0x100]]
    %v156 = vstv %s155
    %v157 = vmul.f32 %v156, %v110
    %s158 = sld [smem:[#allocation7 + $0x101]]
    %v159 = vstv %s158
    %v160 = vmul.f32 %v159, %v112
    %v161 = vadd.f32 %v157, %v160
    %s162 = sld [smem:[#allocation7 + $0x102]]
    %v163 = vstv %s162
    %v164 = vmul.f32 %v163, %v114
    %v165 = vadd.f32 %v161, %v164
    %s166 = sld [smem:[#allocation8 + $0x2]]
    %v167 = vstv %s166
    %v168 = vadd.f32 %v165, %v167
    %v169 = vxor.u32 %v168, 2147483648
    %v170 = vmul.f32 %v169, 1.442695
    %v171 = vpow.pop %v170
    %v172 = vadd.f32 %v171, 1.0
    %v173 = vrcp.pop %v172
    %v174 = vmul.f32 1.0, %v173
    %s175 = sld [smem:[#allocation9]]
    %v176 = vstv %s175
    %v177 = vmul.f32 %v176, %v134
    %s178 = sld [smem:[#allocation9 + $0x1]]
    %v179 = vstv %s178
    %v180 = vmul.f32 %v179, %v154
    %v181 = vadd.f32 %v177, %v180
    %s182 = sld [smem:[#allocation9 + $0x2]]
    %v183 = vstv %s182
    %v184 = vmul.f32 %v183, %v174
    %v185 = vadd.f32 %v181, %v184
    %s186 = sld [smem:[#allocation11]]
    %v187 = vstv %s186
    %v188 = vadd.f32 %v185, %v187
    %v189 = vmax.f32 %v188, 0.0
    %s190 = sld [smem:[#allocation9 + $0x80]]
    %v191 = vstv %s190
    %v192 = vmul.f32 %v191, %v134
    %s193 = sld [smem:[#allocation9 + $0x81]]
    %v194 = vstv %s193
    %v195 = vmul.f32 %v194, %v154
    %v196 = vadd.f32 %v192, %v195
    %s197 = sld [smem:[#allocation9 + $0x82]]
    %v198 = vstv %s197
    %v199 = vmul.f32 %v198, %v174
    %v200 = vadd.f32 %v196, %v199
    %s201 = sld [smem:[#allocation11 + $0x1]]
    %v202 = vstv %s201
    %v203 = vadd.f32 %v200, %v202
    %v204 = vmax.f32 %v203, 0.0
    %s205 = sld [smem:[#allocation12]]
    %s206 = sld [smem:[#allocation12 + $0x80]]
    %s207 = ssub.f32 %s205, %s206
    %s208 = sld [smem:[#allocation12 + $0x1]]
    %s209 = sld [smem:[#allocation12 + $0x81]]
    %s210 = ssub.f32 %s208, %s209
    %s211 = sld [smem:[#allocation14]]
    %s212 = sld [smem:[#allocation14 + $0x1]]
    %s213 = ssub.f32 %s211, %s212
    %v214 = vstv %s207
    %v215 = vmul.f32 %v214, %v189
    %v216 = vstv %s210
    %v217 = vmul.f32 %v216, %v204
    %v218 = vadd.f32 %v215, %v217
    %v219 = vstv %s213
    %v220 = vadd.f32 %v218, %v219
    %v221 = vxor.u32 %v220, 2147483648
    %v222 = vmul.f32 %v221, 1.442695
    %v223 = vpow.pop %v222
    %v224 = vadd.f32 %v223, 1.0
    %v225 = vrcp.pop %v224
    %v226 = vmul.f32 1.0, %v225
    %227 = vst [vmem:[#allocation15] sm:$0xff] %v226
    %v228 = vsub.f32 1.0, %v226
    %s229 = scalar_lea.vmem [#allocation15], 8
    %230 = vst [vmem:[%s229] sm:$0xff] %v228
    // Predicated region
    $region58: #{tpu_custom_call.1} parent=1 // pred_check
      _
    $region59: #{tpu_custom_call.1} parent=1 // pred_check_branch
      %232 = sbr.rel (0) target = $region61
    $region60: #{tpu_custom_call.1} parent=1 // pred_region
      %s234 = ssub.s32 256, 256
      %235 = vsyncadd [#allocation4], %s234
      %s236 = sshll.u32 [#allocation15], 4
      %s237 = int_to_ptr.vmem [resolvable:$true] %s236
      %242 = dma.vmem_to_hbm [thread:$0]  %s237, 256, %s7, [#allocation4], 128, 128, 8
    $region61: #{tpu_custom_call.1} parent=1 // pred_fallthru
      _
    // Predicated region
    $region62: #{tpu_custom_call.1} parent=1 // pred_check
      _
    $region63: #{tpu_custom_call.1} parent=1 // pred_check_branch
      %244 = sbr.rel (0) target = $region65
    $region64: #{tpu_custom_call.1} parent=1 // pred_region
      %245 = dma.done [#allocation4], 256
    $region65: #{tpu_custom_call.1} parent=1 // pred_fallthru
      _
    %246 = vsyncpa [#allocation3], 1
    %247 = vsyncpa [#allocation4], 1
    %248 = vsyncpa [#allocation5], 1
    %249 = vsyncpa [#allocation6], 1
    %250 = vsyncpa [#allocation10], 1
    %251 = vsyncpa [#allocation13], 1

</llo_original>
